<compile_context>
chip_gen: v7x
topology: tpu7x:2x2x1
jax: 0.10.0
libtpu: 0.0.40
codegen_flags: <defaults>
</compile_context>

<pallas_src>
import functools

import jax
import jax.numpy as jnp
from jax.experimental import pallas as pl
from jax.experimental.pallas import tpu as pltpu

LN_EPS = 1e-5


def _round_up(x, m):
    return ((x + m - 1) // m) * m


def _upsample_kernel(x_ref, w_ref, b_ref, g_ref, be_ref, o_ref, *, cout):
    # x_ref : (1, Cin, TM)  input tile, pixels on the lane axis
    # w_ref : (R, Cin)      fused ConvTranspose weights, row r = tap*Cout + c
    # b_ref : (R, 1)        conv bias, tiled over the 4 taps
    # g_ref : (R, 1)        LayerNorm gamma, tiled over the 4 taps
    # be_ref: (R, 1)        LayerNorm beta, tiled over the 4 taps
    # o_ref : (1, R, TM)    output tile: row r = tap*Cout + c, lane = pixel
    x = x_ref[0]                                                      # [Cin, TM]
    # all 4 taps in a single MXU call; f32 accumulation
    y = jnp.dot(w_ref[...], x, preferred_element_type=jnp.float32)   # [R, TM]
    y = jnp.maximum(y + b_ref[...], 0.0)                              # bias + ReLU
    # LayerNorm over the channel group of each tap (rows t*Cout..t*Cout+Cout-1)
    parts = []
    for t in range(4):                                                # static, unrolled
        yt = y[t * cout:(t + 1) * cout, :]                            # [Cout, TM]
        mean = jnp.mean(yt, axis=0, keepdims=True)                    # [1, TM]
        d = yt - mean
        var = jnp.mean(d * d, axis=0, keepdims=True)
        parts.append(d * jax.lax.rsqrt(var + LN_EPS))
    yn = jnp.concatenate(parts, axis=0)                               # [R, TM]
    o_ref[0] = (yn * g_ref[...] + be_ref[...]).astype(o_ref.dtype)


def upsample_forward(x_nchw, w_t, b, gamma, beta, *, tm=2048):
    """x_nchw: [N, Cin, H, W]; w_t: torch ConvTranspose2d weight [Cin, Cout, 2, 2]."""
    N, Cin, H, W = x_nchw.shape
    Cout = w_t.shape[1]
    R = 4 * Cout
    HW = H * W

    # tile size: multiple of 128, as large as possible (bounded by request / HW)
    tm = max(128, (min(tm, _round_up(HW, 128)) // 128) * 128)
    HWp = _round_up(HW, tm)

    # free view of NCHW as channels-first pixels (no input transpose)
    x_cm = x_nchw.reshape(N, Cin, HW)
    if HWp != HW:
        x_cm = jnp.pad(x_cm, ((0, 0), (0, 0), (0, HWp - HW)))

    # fused tap weights: row r = (ki*2 + kj)*Cout + o  <-  w_t[c, o, ki, kj]
    w_rows = jnp.transpose(w_t, (2, 3, 1, 0)).reshape(R, Cin).astype(jnp.float32)
    b_row = jnp.tile(b.astype(jnp.float32), 4).reshape(R, 1)
    g_row = jnp.tile(gamma.astype(jnp.float32), 4).reshape(R, 1)
    be_row = jnp.tile(beta.astype(jnp.float32), 4).reshape(R, 1)

    # advisory cost estimate: kernel is HBM-bandwidth bound
    m_tot = N * HWp
    cost = pl.CostEstimate(
        flops=int(2 * m_tot * Cin * R + 10 * m_tot * R),
        transcendentals=int(4 * m_tot),
        bytes_accessed=int(4 * (N * (Cin + R) * HWp + R * (Cin + 3))),
    )
    # VMEM budget: double-buffered x/out tiles + resident params (+ headroom),
    # capped at 48 MiB so it also fits v7x's 64 MiB physical VMEM.
    need = 2 * (Cin + R) * tm * 4 + (R * Cin + 3 * R) * 4
    vmem_limit = int(min(48 * 1024 * 1024, max(8 * 1024 * 1024, 4 * need)))

    kernel = functools.partial(_upsample_kernel, cout=Cout)
    out_cm = pl.pallas_call(
        kernel,
        out_shape=jax.ShapeDtypeStruct((N, R, HWp), x_nchw.dtype),
        grid_spec=pltpu.PrefetchScalarGridSpec(
            num_scalar_prefetch=0,
            grid=(N, HWp // tm),
            in_specs=[
                pl.BlockSpec((1, Cin, tm), lambda n, j: (n, 0, j)),
                pl.BlockSpec((R, Cin), lambda n, j: (0, 0)),
                pl.BlockSpec((R, 1), lambda n, j: (0, 0)),
                pl.BlockSpec((R, 1), lambda n, j: (0, 0)),
                pl.BlockSpec((R, 1), lambda n, j: (0, 0)),
            ],
            out_specs=pl.BlockSpec((1, R, tm), lambda n, j: (n, 0, j)),
        ),
        compiler_params=pltpu.CompilerParams(
            dimension_semantics=("parallel", "parallel"),
            vmem_limit_bytes=vmem_limit),
        cost_estimate=cost,
    )(x_cm, w_rows, b_row, g_row, be_row)

    # glue: single transpose interleaving the 4 taps into NCHW.
    # out_cm[n, (ki*2+kj)*Cout + o, i*W + j] -> out[n, o, 2i+ki, 2j+kj]
    out = out_cm[:, :, :HW].reshape(N, 2, 2, Cout, H, W)   # (n, ki, kj, o, i, j)
    out = jnp.transpose(out, (0, 3, 4, 1, 5, 2))           # (n, o, i, ki, j, kj)
    return out.reshape(N, Cout, 2 * H, 2 * W)


def upsample_reference(x_nchw, w_t, b, gamma, beta):
    """Pure-JAX reference mirroring the PyTorch module (for validation)."""
    N, Cin, H, W = x_nchw.shape
    Cout = w_t.shape[1]
    # ConvTranspose2d k=2 s=2
    y = jnp.einsum('nchw,cokl->nohwkl', x_nchw, w_t)       # [N,Cout,H,W,2,2]
    y = jnp.transpose(y, (0, 1, 2, 4, 3, 5)).reshape(N, Cout, 2 * H, 2 * W)
    y = y + b[None, :, None, None]
    y = jnp.maximum(y, 0.0)
    # LayerNorm over channel dim (Permute -> LayerNorm(C) -> Permute)
    yt = jnp.transpose(y, (0, 2, 3, 1))
    mean = jnp.mean(yt, axis=-1, keepdims=True)
    var = jnp.mean((yt - mean) ** 2, axis=-1, keepdims=True)
    yt = (yt - mean) * jax.lax.rsqrt(var + LN_EPS) * gamma + beta
    return jnp.transpose(yt, (0, 3, 1, 2))


if __name__ == "__main__":
    key = jax.random.PRNGKey(0)
    k_x, k_w, k_b, k_g, k_be = jax.random.split(key, 5)

    N, Cin, Cout, H, W = 2, 8, 4, 16, 16
    x = jax.random.normal(k_x, (N, Cin, H, W), dtype=jnp.float32)
    # ConvTranspose2d weight layout: [Cin, Cout, 2, 2]
    w_t = jax.random.normal(k_w, (Cin, Cout, 2, 2), dtype=jnp.float32) * 0.2
    b = jax.random.normal(k_b, (Cout,), dtype=jnp.float32) * 0.1
    gamma = 1.0 + 0.1 * jax.random.normal(k_g, (Cout,), dtype=jnp.float32)
    beta = 0.1 * jax.random.normal(k_be, (Cout,), dtype=jnp.float32)

    out = upsample_forward(x, w_t, b, gamma, beta)
    out = jax.block_until_ready(out)

    ref = upsample_reference(x, w_t, b, gamma, beta)
    assert out.shape == (N, Cout, 2 * H, 2 * W), out.shape
    assert jnp.allclose(out, ref, atol=1e-4, rtol=1e-4), float(
        jnp.max(jnp.abs(out - ref)))

    print("KERNEL_OK")
</pallas_src>

<mosaic_0001>
module attributes {stable_mosaic.version = 11 : i64} {
  func.func @_upsample_kernel(%arg0: i32, %arg1: i32, %arg2: memref<1x8x256xf32, #tpu.memory_space<vmem>>, %arg3: memref<16x8xf32, #tpu.memory_space<vmem>>, %arg4: memref<16x1xf32, #tpu.memory_space<vmem>>, %arg5: memref<16x1xf32, #tpu.memory_space<vmem>>, %arg6: memref<16x1xf32, #tpu.memory_space<vmem>>, %arg7: memref<1x16x256xf32, #tpu.memory_space<vmem>>) attributes {dimension_semantics = [#tpu.dimension_semantics<parallel>, #tpu.dimension_semantics<parallel>], iteration_bounds = array<i64: 2, 1>, scalar_prefetch = 0 : i64, scratch_operands = 0 : i64, tpu.core_type = #tpu.core_type<tc>, window_params = [{transform_indices = @transform_0, window_bounds = array<i64: 1, 8, 256>}, {pipeline_mode = #tpu.pipeline_mode<synchronous>, transform_indices = @transform_1, window_bounds = array<i64: 16, 8>}, {pipeline_mode = #tpu.pipeline_mode<synchronous>, transform_indices = @transform_2, window_bounds = array<i64: 16, 1>}, {pipeline_mode = #tpu.pipeline_mode<synchronous>, transform_indices = @transform_3, window_bounds = array<i64: 16, 1>}, {pipeline_mode = #tpu.pipeline_mode<synchronous>, transform_indices = @transform_4, window_bounds = array<i64: 16, 1>}, {transform_indices = @transform_5, window_bounds = array<i64: 1, 16, 256>}]} {
    %c0 = arith.constant 0 : index
    %c0_0 = arith.constant 0 : index
    %c0_1 = arith.constant 0 : index
    %0 = vector.load %arg2[%c0, %c0_0, %c0_1] : memref<1x8x256xf32, #tpu.memory_space<vmem>>, vector<1x8x256xf32>
    %1 = vector.shape_cast %0 : vector<1x8x256xf32> to vector<8x256xf32>
    %c0_2 = arith.constant 0 : index
    %c0_3 = arith.constant 0 : index
    %2 = vector.load %arg3[%c0_2, %c0_3] : memref<16x8xf32, #tpu.memory_space<vmem>>, vector<16x8xf32>
    %cst = arith.constant dense<0.000000e+00> : vector<16x256xf32>
    %3 = tpu.matmul %2, %1, %cst {dimension_numbers = #tpu.dot_dimension_numbers<[1], [0], [0], [1], [0, 0, 1, 1], [], []>} : vector<16x8xf32>, vector<8x256xf32>, vector<16x256xf32> -> vector<16x256xf32>
    %c0_4 = arith.constant 0 : index
    %c0_5 = arith.constant 0 : index
    %4 = vector.load %arg4[%c0_4, %c0_5] : memref<16x1xf32, #tpu.memory_space<vmem>>, vector<16x1xf32>
    %5 = vector.broadcast %4 : vector<16x1xf32> to vector<16x256xf32>
    %6 = arith.addf %3, %5 : vector<16x256xf32>
    %cst_6 = arith.constant 0.000000e+00 : f32
    %7 = vector.broadcast %cst_6 : f32 to vector<16x256xf32>
    %8 = arith.maximumf %6, %7 : vector<16x256xf32>
    %9 = vector.extract_strided_slice %8 {offsets = [0, 0], sizes = [4, 256], strides = [1, 1]} : vector<16x256xf32> to vector<4x256xf32>
    %cst_7 = arith.constant dense<0.000000e+00> : vector<256xf32>
    %10 = vector.multi_reduction <add>, %9, %cst_7 [0] : vector<4x256xf32> to vector<256xf32>
    %11 = vector.shape_cast %10 : vector<256xf32> to vector<1x256xf32>
    %cst_8 = arith.constant 4.000000e+00 : f32
    %12 = vector.broadcast %cst_8 : f32 to vector<1x256xf32>
    %13 = arith.divf %11, %12 : vector<1x256xf32>
    %14 = vector.broadcast %13 : vector<1x256xf32> to vector<4x256xf32>
    %15 = arith.subf %9, %14 : vector<4x256xf32>
    %16 = arith.mulf %15, %15 : vector<4x256xf32>
    %cst_9 = arith.constant dense<0.000000e+00> : vector<256xf32>
    %17 = vector.multi_reduction <add>, %16, %cst_9 [0] : vector<4x256xf32> to vector<256xf32>
    %18 = vector.shape_cast %17 : vector<256xf32> to vector<1x256xf32>
    %cst_10 = arith.constant 4.000000e+00 : f32
    %19 = vector.broadcast %cst_10 : f32 to vector<1x256xf32>
    %20 = arith.divf %18, %19 : vector<1x256xf32>
    %cst_11 = arith.constant 9.99999974E-6 : f32
    %21 = vector.broadcast %cst_11 : f32 to vector<1x256xf32>
    %22 = arith.addf %20, %21 : vector<1x256xf32>
    %23 = math.rsqrt %22 : vector<1x256xf32>
    %24 = vector.broadcast %23 : vector<1x256xf32> to vector<4x256xf32>
    %25 = arith.mulf %15, %24 : vector<4x256xf32>
    %26 = vector.extract_strided_slice %8 {offsets = [4, 0], sizes = [4, 256], strides = [1, 1]} : vector<16x256xf32> to vector<4x256xf32>
    %cst_12 = arith.constant dense<0.000000e+00> : vector<256xf32>
    %27 = vector.multi_reduction <add>, %26, %cst_12 [0] : vector<4x256xf32> to vector<256xf32>
    %28 = vector.shape_cast %27 : vector<256xf32> to vector<1x256xf32>
    %cst_13 = arith.constant 4.000000e+00 : f32
    %29 = vector.broadcast %cst_13 : f32 to vector<1x256xf32>
    %30 = arith.divf %28, %29 : vector<1x256xf32>
    %31 = vector.broadcast %30 : vector<1x256xf32> to vector<4x256xf32>
    %32 = arith.subf %26, %31 : vector<4x256xf32>
    %33 = arith.mulf %32, %32 : vector<4x256xf32>
    %cst_14 = arith.constant dense<0.000000e+00> : vector<256xf32>
    %34 = vector.multi_reduction <add>, %33, %cst_14 [0] : vector<4x256xf32> to vector<256xf32>
    %35 = vector.shape_cast %34 : vector<256xf32> to vector<1x256xf32>
    %cst_15 = arith.constant 4.000000e+00 : f32
    %36 = vector.broadcast %cst_15 : f32 to vector<1x256xf32>
    %37 = arith.divf %35, %36 : vector<1x256xf32>
    %cst_16 = arith.constant 9.99999974E-6 : f32
    %38 = vector.broadcast %cst_16 : f32 to vector<1x256xf32>
    %39 = arith.addf %37, %38 : vector<1x256xf32>
    %40 = math.rsqrt %39 : vector<1x256xf32>
    %41 = vector.broadcast %40 : vector<1x256xf32> to vector<4x256xf32>
    %42 = arith.mulf %32, %41 : vector<4x256xf32>
    %43 = vector.extract_strided_slice %8 {offsets = [8, 0], sizes = [4, 256], strides = [1, 1]} : vector<16x256xf32> to vector<4x256xf32>
    %cst_17 = arith.constant dense<0.000000e+00> : vector<256xf32>
    %44 = vector.multi_reduction <add>, %43, %cst_17 [0] : vector<4x256xf32> to vector<256xf32>
    %45 = vector.shape_cast %44 : vector<256xf32> to vector<1x256xf32>
    %cst_18 = arith.constant 4.000000e+00 : f32
    %46 = vector.broadcast %cst_18 : f32 to vector<1x256xf32>
    %47 = arith.divf %45, %46 : vector<1x256xf32>
    %48 = vector.broadcast %47 : vector<1x256xf32> to vector<4x256xf32>
    %49 = arith.subf %43, %48 : vector<4x256xf32>
    %50 = arith.mulf %49, %49 : vector<4x256xf32>
    %cst_19 = arith.constant dense<0.000000e+00> : vector<256xf32>
    %51 = vector.multi_reduction <add>, %50, %cst_19 [0] : vector<4x256xf32> to vector<256xf32>
    %52 = vector.shape_cast %51 : vector<256xf32> to vector<1x256xf32>
    %cst_20 = arith.constant 4.000000e+00 : f32
    %53 = vector.broadcast %cst_20 : f32 to vector<1x256xf32>
    %54 = arith.divf %52, %53 : vector<1x256xf32>
    %cst_21 = arith.constant 9.99999974E-6 : f32
    %55 = vector.broadcast %cst_21 : f32 to vector<1x256xf32>
    %56 = arith.addf %54, %55 : vector<1x256xf32>
    %57 = math.rsqrt %56 : vector<1x256xf32>
    %58 = vector.broadcast %57 : vector<1x256xf32> to vector<4x256xf32>
    %59 = arith.mulf %49, %58 : vector<4x256xf32>
    %60 = vector.extract_strided_slice %8 {offsets = [12, 0], sizes = [4, 256], strides = [1, 1]} : vector<16x256xf32> to vector<4x256xf32>
    %cst_22 = arith.constant dense<0.000000e+00> : vector<256xf32>
    %61 = vector.multi_reduction <add>, %60, %cst_22 [0] : vector<4x256xf32> to vector<256xf32>
    %62 = vector.shape_cast %61 : vector<256xf32> to vector<1x256xf32>
    %cst_23 = arith.constant 4.000000e+00 : f32
    %63 = vector.broadcast %cst_23 : f32 to vector<1x256xf32>
    %64 = arith.divf %62, %63 : vector<1x256xf32>
    %65 = vector.broadcast %64 : vector<1x256xf32> to vector<4x256xf32>
    %66 = arith.subf %60, %65 : vector<4x256xf32>
    %67 = arith.mulf %66, %66 : vector<4x256xf32>
    %cst_24 = arith.constant dense<0.000000e+00> : vector<256xf32>
    %68 = vector.multi_reduction <add>, %67, %cst_24 [0] : vector<4x256xf32> to vector<256xf32>
    %69 = vector.shape_cast %68 : vector<256xf32> to vector<1x256xf32>
    %cst_25 = arith.constant 4.000000e+00 : f32
    %70 = vector.broadcast %cst_25 : f32 to vector<1x256xf32>
    %71 = arith.divf %69, %70 : vector<1x256xf32>
    %cst_26 = arith.constant 9.99999974E-6 : f32
    %72 = vector.broadcast %cst_26 : f32 to vector<1x256xf32>
    %73 = arith.addf %71, %72 : vector<1x256xf32>
    %74 = math.rsqrt %73 : vector<1x256xf32>
    %75 = vector.broadcast %74 : vector<1x256xf32> to vector<4x256xf32>
    %76 = arith.mulf %66, %75 : vector<4x256xf32>
    %77 = tpu.concatenate %25, %42, %59, %76 in 0 : vector<4x256xf32>, vector<4x256xf32>, vector<4x256xf32>, vector<4x256xf32> -> vector<16x256xf32>
    %c0_27 = arith.constant 0 : index
    %c0_28 = arith.constant 0 : index
    %78 = vector.load %arg5[%c0_27, %c0_28] : memref<16x1xf32, #tpu.memory_space<vmem>>, vector<16x1xf32>
    %79 = vector.broadcast %78 : vector<16x1xf32> to vector<16x256xf32>
    %80 = arith.mulf %77, %79 : vector<16x256xf32>
    %c0_29 = arith.constant 0 : index
    %c0_30 = arith.constant 0 : index
    %81 = vector.load %arg6[%c0_29, %c0_30] : memref<16x1xf32, #tpu.memory_space<vmem>>, vector<16x1xf32>
    %82 = vector.broadcast %81 : vector<16x1xf32> to vector<16x256xf32>
    %83 = arith.addf %80, %82 : vector<16x256xf32>
    %c0_31 = arith.constant 0 : index
    %c0_32 = arith.constant 0 : index
    %c0_33 = arith.constant 0 : index
    %84 = vector.load %arg7[%c0_31, %c0_32, %c0_33] : memref<1x16x256xf32, #tpu.memory_space<vmem>>, vector<1x16x256xf32>
    %85 = vector.shape_cast %84 : vector<1x16x256xf32> to vector<16x256xf32>
    %86 = vector.shape_cast %83 : vector<16x256xf32> to vector<1x16x256xf32>
    tpu.vector_store %arg7[%c0_31, %c0_32, %c0_33], %86 {strides = array<i32>} : memref<1x16x256xf32, #tpu.memory_space<vmem>>, vector<1x16x256xf32>,
    return
  }
  func.func @transform_0(%arg0: i32, %arg1: i32) -> (i32, i32, i32) {
    %c0_i32 = arith.constant 0 : i32
    %c0_i32_0 = arith.constant 0 : i32
    return %arg0, %c0_i32, %arg1 : i32, i32, i32
  }
  func.func @transform_1(%arg0: i32, %arg1: i32) -> (i32, i32) {
    %c0_i32 = arith.constant 0 : i32
    %c0_i32_0 = arith.constant 0 : i32
    %c0_i32_1 = arith.constant 0 : i32
    return %c0_i32, %c0_i32_0 : i32, i32
  }
  func.func @transform_2(%arg0: i32, %arg1: i32) -> (i32, i32) {
    %c0_i32 = arith.constant 0 : i32
    %c0_i32_0 = arith.constant 0 : i32
    %c0_i32_1 = arith.constant 0 : i32
    return %c0_i32, %c0_i32_0 : i32, i32
  }
  func.func @transform_3(%arg0: i32, %arg1: i32) -> (i32, i32) {
    %c0_i32 = arith.constant 0 : i32
    %c0_i32_0 = arith.constant 0 : i32
    %c0_i32_1 = arith.constant 0 : i32
    return %c0_i32, %c0_i32_0 : i32, i32
  }
  func.func @transform_4(%arg0: i32, %arg1: i32) -> (i32, i32) {
    %c0_i32 = arith.constant 0 : i32
    %c0_i32_0 = arith.constant 0 : i32
    %c0_i32_1 = arith.constant 0 : i32
    return %c0_i32, %c0_i32_0 : i32, i32
  }
  func.func @transform_5(%arg0: i32, %arg1: i32) -> (i32, i32, i32) {
    %c0_i32 = arith.constant 0 : i32
    %c0_i32_0 = arith.constant 0 : i32
    return %arg0, %c0_i32, %arg1 : i32, i32, i32
  }
}

</mosaic_0001>

<llo_original>
// kernel: tpu_custom_call.1
$region0: #{tpu_custom_call.1}
  #allocation0 [shape = 'u32[]', space=smem, size = 0x4, offset = 0x4, fixed_abs, tag = 'smem constant byte address 0x4 - core index']
  #allocation1 [shape = 'u32[144,128]{1,0:T(1,128)}', space=vmem, size = 0x12000, scoped, tag = 'internal scratch']
  %s0 = inlined_call_operand.vmem [shape: f32[2,8,256], index: 0, kind: input, shape index: {}]
  %s1 = inlined_call_operand.vmem [shape: f32[16,8], index: 1, kind: input, shape index: {}]
  %s2 = inlined_call_operand.vmem [shape: f32[16,1], index: 2, kind: input, shape index: {}]
  %s3 = inlined_call_operand.vmem [shape: f32[16,1], index: 3, kind: input, shape index: {}]
  %s4 = inlined_call_operand.vmem [shape: f32[16,1], index: 4, kind: input, shape index: {}]
  %s5 = inlined_call_operand.hbm [shape: f32[2,16,256], index: 5, kind: output, shape index: {}]
  %s6 = sld [smem:[#allocation0]]
  $region53: #{tpu_custom_call.1} parent=0
    _
  %s8 = ssub.s32 1, %s6
  %s9 = scalar_select 0, %s8, %s6
  $region1: #{tpu_custom_call.1} parent=0
    #allocation2 [shape = 'u8[32768]{0}', space=vmem, size = 0x8000, scoped, tag = 'output window, operand 0']
    #allocation3 [shape = 's32[2]{0}', space=sflag, size = 0x8, scoped, tag = 'scoped memory for tpu_custom_call.1']
    %10 = vsyncpa [#allocation3], 0
    %s11 = scalar_lea.sflag [#allocation3], 1
    %12 = vsyncpa %s11, 0
    loop: start=0, step=1, limit=4
    $region2: #{tpu_custom_call.1} parent=1 // loop_pre_header
      _
    $region3: #{tpu_custom_call.1} parent=1 // loop_header
      %s14 = sphi 0, %s18
      %p15 = scmp.ge.s32.totalorder %s14, 4
      %s21 = sphi 0, %s33
      %s22 = sphi 0, %s29
      %s23 = sphi 0, %s21
      %s24 = sphi 0, %s22
      %s25 = sphi 0, %s23
      %s26 = sphi 0, %s24
      %s38 = sphi 0, %s40
      %s41 = sphi 0, %s38
      %s42 = sphi 0, %s41
      %s58 = sphi 0, %s42
      %s62 = sphi 0, %s62
      %s64 = sphi 0, %s62
      %s65 = sphi 0, %s64
      %s79 = sphi 0, %s65
      %s83 = sphi 0, %s83
      %s85 = sphi 0, %s83
      %s86 = sphi 0, %s85
      %s100 = sphi 0, %s86
      %s104 = sphi 0, %s104
      %s106 = sphi 0, %s104
      %s107 = sphi 0, %s106
      %s121 = sphi 0, %s107
      %s125 = sphi 0, %s125
      %s127 = sphi 0, %s125
      %s128 = sphi 0, %s127
      %s142 = sphi 0, %s128
      %s150 = sphi 0, %s152
      %s153 = sphi 0, %s150
      %s154 = sphi 0, %s153
      %s170 = sphi 0, %s154
    $region4: #{tpu_custom_call.1} parent=1 // loop_header_branch
      %17 = sbr.rel (%p15) target = $region8
    $region5: #{tpu_custom_call.1} parent=1 // loop_body
      %s19 = ssub.s32 %s14, 1
      %s20 = ssub.s32 %s14, 2
      %s27 = sadd.s32 1, %s22
      %p28 = scmp.ge.s32.totalorder %s27, 1
      %s29 = scalar_select %p28, 0, %s27
      %s30 = sadd.s32 1, %s21
      %s31 = scalar_select %p28, %s30, %s21
      %p32 = scmp.ge.s32.totalorder %s31, 2
      %s33 = scalar_select %p32, 0, %s31
      %s34 = ssub.s32 %s21, %s33
      %s35 = ssub.s32 %s22, %s29
      %s36 = sor.u32 %s34, %s35
      %p37 = scmp.eq.s32.totalorder %s36, 0
      %s39 = sadd.s32 %s38, 1
      %s40 = scalar_select %p37, %s38, %s39
      %p43 = pneg %p37
      %p44 = scmp.eq.s32.totalorder %s14, 1
      %p45 = por %p43, %p44
      %p46 = scmp.ne.s32.totalorder %s38, %s41
      %p47 = scmp.eq.s32.totalorder %s14, 0
      %p48 = por %p46, %p47
      %p49 = scmp.ne.s32.totalorder %s38, %s41
      %p50 = scmp.eq.s32.totalorder %s19, 1
      %p51 = por %p49, %p50
      %p52 = scmp.ne.s32.totalorder %s41, %s42
      %p53 = scmp.eq.s32.totalorder %s19, 0
      %p54 = por %p52, %p53
      %p55 = scmp.ne.s32.totalorder %s41, %s42
      %p56 = scmp.eq.s32.totalorder %s20, 1
      %p57 = por %p55, %p56
      %p59 = scmp.ne.s32.totalorder %s42, %s58
      %p60 = scmp.eq.s32.totalorder %s20, 0
      %p61 = por %p59, %p60
      %s63 = sadd.s32 %s62, 1
      %p66 = scmp.eq.s32.totalorder %s14, 1
      %p67 = scmp.ne.s32.totalorder %s62, %s64
      %p68 = scmp.eq.s32.totalorder %s14, 0
      %p69 = por %p67, %p68
      %p70 = scmp.ne.s32.totalorder %s62, %s64
      %p71 = scmp.eq.s32.totalorder %s19, 1
      %p72 = por %p70, %p71
      %p73 = scmp.ne.s32.totalorder %s64, %s65
      %p74 = scmp.eq.s32.totalorder %s19, 0
      %p75 = por %p73, %p74
      %p76 = scmp.ne.s32.totalorder %s64, %s65
      %p77 = scmp.eq.s32.totalorder %s20, 1
      %p78 = por %p76, %p77
      %p80 = scmp.ne.s32.totalorder %s65, %s79
      %p81 = scmp.eq.s32.totalorder %s20, 0
      %p82 = por %p80, %p81
      %s84 = sadd.s32 %s83, 1
      %p87 = scmp.eq.s32.totalorder %s14, 1
      %p88 = scmp.ne.s32.totalorder %s83, %s85
      %p89 = scmp.eq.s32.totalorder %s14, 0
      %p90 = por %p88, %p89
      %p91 = scmp.ne.s32.totalorder %s83, %s85
      %p92 = scmp.eq.s32.totalorder %s19, 1
      %p93 = por %p91, %p92
      %p94 = scmp.ne.s32.totalorder %s85, %s86
      %p95 = scmp.eq.s32.totalorder %s19, 0
      %p96 = por %p94, %p95
      %p97 = scmp.ne.s32.totalorder %s85, %s86
      %p98 = scmp.eq.s32.totalorder %s20, 1
      %p99 = por %p97, %p98
      %p101 = scmp.ne.s32.totalorder %s86, %s100
      %p102 = scmp.eq.s32.totalorder %s20, 0
      %p103 = por %p101, %p102
      %s105 = sadd.s32 %s104, 1
      %p108 = scmp.eq.s32.totalorder %s14, 1
      %p109 = scmp.ne.s32.totalorder %s104, %s106
      %p110 = scmp.eq.s32.totalorder %s14, 0
      %p111 = por %p109, %p110
      %p112 = scmp.ne.s32.totalorder %s104, %s106
      %p113 = scmp.eq.s32.totalorder %s19, 1
      %p114 = por %p112, %p113
      %p115 = scmp.ne.s32.totalorder %s106, %s107
      %p116 = scmp.eq.s32.totalorder %s19, 0
      %p117 = por %p115, %p116
      %p118 = scmp.ne.s32.totalorder %s106, %s107
      %p119 = scmp.eq.s32.totalorder %s20, 1
      %p120 = por %p118, %p119
      %p122 = scmp.ne.s32.totalorder %s107, %s121
      %p123 = scmp.eq.s32.totalorder %s20, 0
      %p124 = por %p122, %p123
      %s126 = sadd.s32 %s125, 1
      %p129 = scmp.eq.s32.totalorder %s14, 1
      %p130 = scmp.ne.s32.totalorder %s125, %s127
      %p131 = scmp.eq.s32.totalorder %s14, 0
      %p132 = por %p130, %p131
      %p133 = scmp.ne.s32.totalorder %s125, %s127
      %p134 = scmp.eq.s32.totalorder %s19, 1
      %p135 = por %p133, %p134
      %p136 = scmp.ne.s32.totalorder %s127, %s128
      %p137 = scmp.eq.s32.totalorder %s19, 0
      %p138 = por %p136, %p137
      %p139 = scmp.ne.s32.totalorder %s127, %s128
      %p140 = scmp.eq.s32.totalorder %s20, 1
      %p141 = por %p139, %p140
      %p143 = scmp.ne.s32.totalorder %s128, %s142
      %p144 = scmp.eq.s32.totalorder %s20, 0
      %p145 = por %p143, %p144
      %s146 = ssub.s32 %s21, %s33
      %s147 = ssub.s32 %s22, %s29
      %s148 = sor.u32 %s146, %s147
      %p149 = scmp.eq.s32.totalorder %s148, 0
      %s151 = sadd.s32 %s150, 1
      %s152 = scalar_select %p149, %s150, %s151
      %p155 = pneg %p149
      %p156 = scmp.eq.s32.totalorder %s14, 1
      %p157 = por %p155, %p156
      %p158 = scmp.ne.s32.totalorder %s150, %s153
      %p159 = scmp.eq.s32.totalorder %s14, 0
      %p160 = por %p158, %p159
      %p161 = scmp.ne.s32.totalorder %s150, %s153
      %p162 = scmp.eq.s32.totalorder %s19, 1
      %p163 = por %p161, %p162
      %p164 = scmp.ne.s32.totalorder %s153, %s154
      %p165 = scmp.eq.s32.totalorder %s19, 0
      %p166 = por %p164, %p165
      %p167 = scmp.ne.s32.totalorder %s153, %s154
      %p168 = scmp.eq.s32.totalorder %s20, 1
      %p169 = por %p167, %p168
      %p171 = scmp.ne.s32.totalorder %s154, %s170
      %p172 = scmp.eq.s32.totalorder %s20, 0
      %p173 = por %p171, %p172
      %p174 = scmp.le.s32.totalorder 1, %s14
      %p175 = scmp.lt.s32.totalorder %s14, 3
      %p176 = pnand %p174, %p175
      %p177 = pneg %p176
      // Predicated region
      $region9: #{tpu_custom_call.1} parent=5 // pred_check
        _
      $region10: #{tpu_custom_call.1} parent=5 // pred_check_branch
        %179 = sbr.rel (%p176) target = $region12
      $region11: #{tpu_custom_call.1} parent=5 // pred_region
        %s180 = ssub.s32 %s14, 1
        // Predicated region
        $region13: #{tpu_custom_call.1} parent=11 // pred_check
          %p181 = pneg %p75
        $region14: #{tpu_custom_call.1} parent=11 // pred_check_branch
          %183 = sbr.rel (%p181) target = $region16
        $region15: #{tpu_custom_call.1} parent=11 // pred_region
          _
        $region16: #{tpu_custom_call.1} parent=11 // pred_fallthru
          _
        // Predicated region
        $region17: #{tpu_custom_call.1} parent=11 // pred_check
          %p184 = pneg %p96
        $region18: #{tpu_custom_call.1} parent=11 // pred_check_branch
          %186 = sbr.rel (%p184) target = $region20
        $region19: #{tpu_custom_call.1} parent=11 // pred_region
          _
        $region20: #{tpu_custom_call.1} parent=11 // pred_fallthru
          _
        // Predicated region
        $region21: #{tpu_custom_call.1} parent=11 // pred_check
          %p187 = pneg %p117
        $region22: #{tpu_custom_call.1} parent=11 // pred_check_branch
          %189 = sbr.rel (%p187) target = $region24
        $region23: #{tpu_custom_call.1} parent=11 // pred_region
          _
        $region24: #{tpu_custom_call.1} parent=11 // pred_fallthru
          _
        // Predicated region
        $region25: #{tpu_custom_call.1} parent=11 // pred_check
          %p190 = pneg %p138
        $region26: #{tpu_custom_call.1} parent=11 // pred_check_branch
          %192 = sbr.rel (%p190) target = $region28
        $region27: #{tpu_custom_call.1} parent=11 // pred_region
          _
        $region28: #{tpu_custom_call.1} parent=11 // pred_fallthru
          _
      $region12: #{tpu_custom_call.1} parent=5 // pred_fallthru
        _
      %p193 = scmp.lt.s32.totalorder %s14, 2
      // Predicated region
      $region29: #{tpu_custom_call.1} parent=5 // pred_check
        %p194 = pneg %p193
      $region30: #{tpu_custom_call.1} parent=5 // pred_check_branch
        %196 = sbr.rel (%p194) target = $region32
      $region31: #{tpu_custom_call.1} parent=5 // pred_region
        // Predicated region
        $region33: #{tpu_custom_call.1} parent=31 // pred_check
          %p197 = pneg %p48
        $region34: #{tpu_custom_call.1} parent=31 // pred_check_branch
          %199 = sbr.rel (%p197) target = $region36
        $region35: #{tpu_custom_call.1} parent=31 // pred_region
          %s200 = smul.u32 2, %s22
          %p201 = scmp.lt.s32.totalorder %s21, 1
          %s202 = scalar_select %p201, %s21, 1
          %p203 = scmp.lt.s32.totalorder %s200, 1
          %s204 = scalar_select %p203, %s200, 1
          %s205 = smul.addr %s202, 2
          %s206 = sadd.s32 %s204, %s205
          %s207 = smul.addr %s206, 8
          %s208 = scalar_lea.vmem %s0, %s207
          %s209 = smul.u32 2, %s22
        $region36: #{tpu_custom_call.1} parent=31 // pred_fallthru
          _
      $region32: #{tpu_custom_call.1} parent=5 // pred_fallthru
        _
      %p210 = scmp.le.s32.totalorder 1, %s14
      %p211 = scmp.lt.s32.totalorder %s14, 3
      %p212 = pnand %p210, %p211
      %p213 = pneg %p212
      // Predicated region
      $region37: #{tpu_custom_call.1} parent=5 // pred_check
        _
      $region38: #{tpu_custom_call.1} parent=5 // pred_check_branch
        %215 = sbr.rel (%p212) target = $region40
      $region39: #{tpu_custom_call.1} parent=5 // pred_region
        %s216 = ssub.s32 %s14, 1
        %s217 = smul.u32 2, %s24
        %p218 = scmp.lt.s32.totalorder %s23, 1
        %s219 = scalar_select %p218, %s23, 1
        %p220 = scmp.lt.s32.totalorder %s217, 1
        %s221 = scalar_select %p220, %s217, 1
        %s222 = smul.addr %s219, 2
        %s223 = sadd.s32 %s221, %s222
        %s224 = smul.addr %s223, 8
        %s225 = scalar_lea.vmem %s0, %s224
        %p226 = pneg %p54
        %p227 = pneg %p51
        %p228 = pneg %p75
        %p229 = pneg %p72
        %p230 = pneg %p96
        %p231 = pneg %p93
        %p232 = pneg %p117
        %p233 = pneg %p114
        %p234 = pneg %p138
        %p235 = pneg %p135
        %p236 = pneg %p166
        %p237 = pneg %p163
        %s238 = sand.u32 %s153, 1
        %s239 = scalar_lea.sflag [#allocation3], %s238
        %s240 = sand.u32 %s153, 1
        %s241 = smul.addr %s240, 32
        %s242 = scalar_lea.vmem [#allocation2], %s241
        %s243 = smul.u32 2, %s24
        %p244 = scmp.lt.s32.totalorder %s23, 1
        %s245 = scalar_select %p244, %s23, 1
        %p246 = scmp.lt.s32.totalorder %s243, 1
        %s247 = scalar_select %p246, %s243, 1
        %s248 = smul.addr %s245, 2
        %s249 = sadd.s32 %s247, %s248
        %s250 = smul.addr %s249, 8
        %s251 = scalar_lea.vmem %s0, %s250
        %s252 = smul.u32 2, %s24
        %s253 = smul.u32 2, %s24
        %v254 = vld [vmem:[%s251] sm:$0xff]
        %v255 = vld [vmem:[%s251 + $0x8] sm:$0xff]
        %v256 = vld [vmem:[%s1] sm:$0xff]
        %v257 = vld [vmem:[%s1 + $0x8] sm:$0xff]
        %v258 = vld [vmem:[%s2] sm:$0xff]
        %v259 = vld [vmem:[%s2 + $0x8] sm:$0xff]
        %261 = vset.pattern.permute.xlu0 0
        %262 = vperm.xlu0 %261, %v258
        %v263 = vpop.permute.xlu0 %262
        %266 = vset.pattern.permute.xlu0 0
        %267 = vperm.xlu0 %266, %v259
        %v268 = vpop.permute.xlu0 %267
        %vm270 = vcmask 64512
        %v272 = vsel %vm270, %v256, 0
        %v275 = vsel %vm270, %v257, 0
        %277 = vmatprep.subr.mxu0 %v255
        %278 = vmatpush1.msra.mxu0 %v254
        %279 = vmatprep.subr.mxu0 0.0
        %280 = vmatpush1.msra.mxu0 0.0
        %281 = vmatprep.subr.mxu0 0.0
        %282 = vmatpush1.msra.mxu0 0.0
        %283 = vmatprep.subr.mxu0 0.0
        %284 = vmatpush1.msra.mxu0 0.0
        %285 = vmatprep.subr.mxu0 0.0
        %286 = vmatpush1.msra.mxu0 0.0
        %287 = vmatprep.subr.mxu0 0.0
        %288 = vmatpush1.msra.mxu0 0.0
        %289 = vmatprep.subr.mxu0 0.0
        %290 = vmatpush1.msra.mxu0 0.0
        %291 = vmatprep.subr.mxu0 0.0
        %292 = vmatpush1.msra.mxu0 0.0
        %293 = vmatprep.subr.mxu0 0.0
        %294 = vmatpush1.msra.mxu0 0.0
        %295 = vmatprep.subr.mxu0 0.0
        %296 = vmatpush1.msra.mxu0 0.0
        %297 = vmatprep.subr.mxu0 0.0
        %298 = vmatpush1.msra.mxu0 0.0
        %299 = vmatprep.subr.mxu0 0.0
        %300 = vmatpush1.msra.mxu0 0.0
        %301 = vmatprep.subr.mxu0 0.0
        %302 = vmatpush1.msra.mxu0 0.0
        %303 = vmatprep.subr.mxu0 0.0
        %304 = vmatpush1.msra.mxu0 0.0
        %305 = vmatprep.subr.mxu0 0.0
        %306 = vmatpush1.msra.mxu0 0.0
        %307 = vmatprep.subr.mxu0 0.0
        %308 = vmatpush1.msra.mxu0 0.0
        %309 = vmatprep.subr.mxu0 0.0
        %310 = vmatpush1.msra.mxu0 0.0
        %311 = vmatprep.subr.mxu0 0.0
        %312 = vmatpush1.msra.mxu0 0.0
        %313 = vmatprep.subr.mxu0 0.0
        %314 = vmatpush1.msra.mxu0 0.0
        %315 = vmatprep.subr.mxu0 0.0
        %316 = vmatpush1.msra.mxu0 0.0
        %317 = vmatprep.subr.mxu0 0.0
        %318 = vmatpush1.msra.mxu0 0.0
        %319 = vmatprep.subr.mxu0 0.0
        %320 = vmatpush1.msra.mxu0 0.0
        %321 = vmatprep.subr.mxu0 0.0
        %322 = vmatpush1.msra.mxu0 0.0
        %323 = vmatprep.subr.mxu0 0.0
        %324 = vmatpush1.msra.mxu0 0.0
        %325 = vmatprep.subr.mxu0 0.0
        %326 = vmatpush1.msra.mxu0 0.0
        %327 = vmatprep.subr.mxu0 0.0
        %328 = vmatpush1.msra.mxu0 0.0
        %329 = vmatprep.subr.mxu0 0.0
        %330 = vmatpush1.msra.mxu0 0.0
        %331 = vmatprep.subr.mxu0 0.0
        %332 = vmatpush1.msra.mxu0 0.0
        %333 = vmatprep.subr.mxu0 0.0
        %334 = vmatpush1.msra.mxu0 0.0
        %335 = vmatprep.subr.mxu0 0.0
        %336 = vmatpush1.msra.mxu0 0.0
        %337 = vmatprep.subr.mxu0 0.0
        %338 = vmatpush1.msra.mxu0 0.0
        %339 = vmatprep.subr.mxu0 0.0
        %340 = vmatpush1.msra.mxu0 0.0
        %341 = vmatprep.mubr.f32.mxu0 0.0
        %342 = vmatmul.mubr.f32.gmra.mrb[0].mxu0 %v272
        %v343 = vpop.f32.mrb[0].mxu0
        %v344 = vadd.f32 %v263, %v343
        %v345 = vpop.f32.mrb[0].mxu0
        %v346 = vadd.f32 %v263, %v345
        %347 = vmatprep.mubr.f32.mxu0 0.0
        %348 = vmatmul.mubr.f32.gmra.mrb[0].mxu0 %v275
        %v349 = vpop.f32.mrb[0].mxu0
        %v350 = vadd.f32 %v268, %v349
        %v351 = vpop.f32.mrb[0].mxu0
        %v352 = vadd.f32 %v268, %v351
        %353 = vdwg.mxu0
        %v354 = vmax.f32 %v344, 0.0
        %v355 = vmax.f32 %v346, 0.0
        %v356 = vmax.f32 %v350, 0.0
        %v357 = vmax.f32 %v352, 0.0
        %vm358 = vcmask 1043456
        %v359 = vsel %vm358, %v354, 0.0
        %v360 = vrot.slane %v359, 4
        %v361 = vadd.f32 %v359, %v360
        %v362 = vrot.slane %v361, 2
        %v363 = vadd.f32 %v361, %v362
        %v364 = vrot.slane %v363, 1
        %v365 = vadd.f32 %v363, %v364
        %v366 = vsel %vm358, %v355, 0.0
        %v367 = vrot.slane %v366, 4
        %v368 = vadd.f32 %v366, %v367
        %v369 = vrot.slane %v368, 2
        %v370 = vadd.f32 %v368, %v369
        %v371 = vrot.slane %v370, 1
        %v372 = vadd.f32 %v370, %v371
        %v373 = vrcp.pop 4.0
        %v374 = vmul.f32 %v365, %v373
        %v375 = vmul.f32 %v372, %v373
        %v376 = vsub.f32 %v354, %v374
        %v377 = vsub.f32 %v355, %v375
        %v378 = vmul.f32 %v376, %v376
        %v379 = vmul.f32 %v377, %v377
        %v380 = vsel %vm358, %v378, 0.0
        %v381 = vrot.slane %v380, 4
        %v382 = vadd.f32 %v380, %v381
        %v383 = vrot.slane %v382, 2
        %v384 = vadd.f32 %v382, %v383
        %v385 = vrot.slane %v384, 1
        %v386 = vadd.f32 %v384, %v385
        %v387 = vsel %vm358, %v379, 0.0
        %v388 = vrot.slane %v387, 4
        %v389 = vadd.f32 %v387, %v388
        %v390 = vrot.slane %v389, 2
        %v391 = vadd.f32 %v389, %v390
        %v392 = vrot.slane %v391, 1
        %v393 = vadd.f32 %v391, %v392
        %v394 = vmul.f32 %v386, %v373
        %v395 = vmul.f32 %v393, %v373
        %v396 = vadd.f32 %v394, 1e-05
        %v397 = vadd.f32 %v395, 1e-05
        %v398 = vrsqrt.pop %v396
        %v399 = vrsqrt.pop %v397
        %v400 = vmul.f32 %v376, %v398
        %v401 = vmul.f32 %v377, %v399
        %v404 = vrot.slane %v354, 4
        %v405 = vrot.slane %v355, 4
        %v408 = vsel %vm358, %v404, 0.0
        %v409 = vrot.slane %v408, 4
        %v410 = vadd.f32 %v408, %v409
        %v411 = vrot.slane %v410, 2
        %v412 = vadd.f32 %v410, %v411
        %v413 = vrot.slane %v412, 1
        %v414 = vadd.f32 %v412, %v413
        %v415 = vsel %vm358, %v405, 0.0
        %v416 = vrot.slane %v415, 4
        %v417 = vadd.f32 %v415, %v416
        %v418 = vrot.slane %v417, 2
        %v419 = vadd.f32 %v417, %v418
        %v420 = vrot.slane %v419, 1
        %v421 = vadd.f32 %v419, %v420
        %v422 = vmul.f32 %v414, %v373
        %v423 = vmul.f32 %v421, %v373
        %v424 = vsub.f32 %v354, %v422
        %v425 = vsub.f32 %v355, %v423
        %v426 = vmul.f32 %v424, %v424
        %v427 = vmul.f32 %v425, %v425
        %v430 = vrot.slane %v426, 4
        %v431 = vrot.slane %v427, 4
        %v434 = vsel %vm358, %v430, 0.0
        %v435 = vrot.slane %v434, 4
        %v436 = vadd.f32 %v434, %v435
        %v437 = vrot.slane %v436, 2
        %v438 = vadd.f32 %v436, %v437
        %v439 = vrot.slane %v438, 1
        %v440 = vadd.f32 %v438, %v439
        %v441 = vsel %vm358, %v431, 0.0
        %v442 = vrot.slane %v441, 4
        %v443 = vadd.f32 %v441, %v442
        %v444 = vrot.slane %v443, 2
        %v445 = vadd.f32 %v443, %v444
        %v446 = vrot.slane %v445, 1
        %v447 = vadd.f32 %v445, %v446
        %v448 = vmul.f32 %v440, %v373
        %v449 = vmul.f32 %v447, %v373
        %v450 = vadd.f32 %v448, 1e-05
        %v451 = vadd.f32 %v449, 1e-05
        %v452 = vrsqrt.pop %v450
        %v453 = vrsqrt.pop %v451
        %v454 = vmul.f32 %v424, %v452
        %v455 = vmul.f32 %v425, %v453
        %v456 = vsel %vm358, %v356, 0.0
        %v457 = vrot.slane %v456, 4
        %v458 = vadd.f32 %v456, %v457
        %v459 = vrot.slane %v458, 2
        %v460 = vadd.f32 %v458, %v459
        %v461 = vrot.slane %v460, 1
        %v462 = vadd.f32 %v460, %v461
        %v463 = vsel %vm358, %v357, 0.0
        %v464 = vrot.slane %v463, 4
        %v465 = vadd.f32 %v463, %v464
        %v466 = vrot.slane %v465, 2
        %v467 = vadd.f32 %v465, %v466
        %v468 = vrot.slane %v467, 1
        %v469 = vadd.f32 %v467, %v468
        %v470 = vmul.f32 %v462, %v373
        %v471 = vmul.f32 %v469, %v373
        %v472 = vsub.f32 %v356, %v470
        %v473 = vsub.f32 %v357, %v471
        %v474 = vmul.f32 %v472, %v472
        %v475 = vmul.f32 %v473, %v473
        %v476 = vsel %vm358, %v474, 0.0
        %v477 = vrot.slane %v476, 4
        %v478 = vadd.f32 %v476, %v477
        %v479 = vrot.slane %v478, 2
        %v480 = vadd.f32 %v478, %v479
        %v481 = vrot.slane %v480, 1
        %v482 = vadd.f32 %v480, %v481
        %v483 = vsel %vm358, %v475, 0.0
        %v484 = vrot.slane %v483, 4
        %v485 = vadd.f32 %v483, %v484
        %v486 = vrot.slane %v485, 2
        %v487 = vadd.f32 %v485, %v486
        %v488 = vrot.slane %v487, 1
        %v489 = vadd.f32 %v487, %v488
        %v490 = vmul.f32 %v482, %v373
        %v491 = vmul.f32 %v489, %v373
        %v492 = vadd.f32 %v490, 1e-05
        %v493 = vadd.f32 %v491, 1e-05
        %v494 = vrsqrt.pop %v492
        %v495 = vrsqrt.pop %v493
        %v496 = vmul.f32 %v472, %v494
        %v497 = vmul.f32 %v473, %v495
        %v500 = vrot.slane %v356, 4
        %v501 = vrot.slane %v357, 4
        %v504 = vsel %vm358, %v500, 0.0
        %v505 = vrot.slane %v504, 4
        %v506 = vadd.f32 %v504, %v505
        %v507 = vrot.slane %v506, 2
        %v508 = vadd.f32 %v506, %v507
        %v509 = vrot.slane %v508, 1
        %v510 = vadd.f32 %v508, %v509
        %v511 = vsel %vm358, %v501, 0.0
        %v512 = vrot.slane %v511, 4
        %v513 = vadd.f32 %v511, %v512
        %v514 = vrot.slane %v513, 2
        %v515 = vadd.f32 %v513, %v514
        %v516 = vrot.slane %v515, 1
        %v517 = vadd.f32 %v515, %v516
        %v518 = vmul.f32 %v510, %v373
        %v519 = vmul.f32 %v517, %v373
        %v520 = vsub.f32 %v356, %v518
        %v521 = vsub.f32 %v357, %v519
        %v522 = vmul.f32 %v520, %v520
        %v523 = vmul.f32 %v521, %v521
        %v526 = vrot.slane %v522, 4
        %v527 = vrot.slane %v523, 4
        %v530 = vsel %vm358, %v526, 0.0
        %v531 = vrot.slane %v530, 4
        %v532 = vadd.f32 %v530, %v531
        %v533 = vrot.slane %v532, 2
        %v534 = vadd.f32 %v532, %v533
        %v535 = vrot.slane %v534, 1
        %v536 = vadd.f32 %v534, %v535
        %v537 = vsel %vm358, %v527, 0.0
        %v538 = vrot.slane %v537, 4
        %v539 = vadd.f32 %v537, %v538
        %v540 = vrot.slane %v539, 2
        %v541 = vadd.f32 %v539, %v540
        %v542 = vrot.slane %v541, 1
        %v543 = vadd.f32 %v541, %v542
        %v544 = vmul.f32 %v536, %v373
        %v545 = vmul.f32 %v543, %v373
        %v546 = vadd.f32 %v544, 1e-05
        %v547 = vadd.f32 %v545, 1e-05
        %v548 = vrsqrt.pop %v546
        %v549 = vrsqrt.pop %v547
        %v550 = vmul.f32 %v520, %v548
        %v551 = vmul.f32 %v521, %v549
        %v552 = vsel %vm358, %v400, %v454
        %v553 = vsel %vm358, %v401, %v455
        %v554 = vsel %vm358, %v496, %v550
        %v555 = vsel %vm358, %v497, %v551
        %v556 = vld [vmem:[%s3] sm:$0xff]
        %v557 = vld [vmem:[%s3 + $0x8] sm:$0xff]
        %559 = vset.pattern.permute.xlu0 0
        %560 = vperm.xlu0 %559, %v556
        %v561 = vpop.permute.xlu0 %560
        %564 = vset.pattern.permute.xlu0 0
        %565 = vperm.xlu0 %564, %v557
        %v566 = vpop.permute.xlu0 %565
        %v568 = vmul.f32 %v552, %v561
        %v569 = vmul.f32 %v553, %v561
        %v570 = vmul.f32 %v554, %v566
        %v571 = vmul.f32 %v555, %v566
        %v572 = vld [vmem:[%s4] sm:$0xff]
        %v573 = vld [vmem:[%s4 + $0x8] sm:$0xff]
        %575 = vset.pattern.permute.xlu0 0
        %576 = vperm.xlu0 %575, %v572
        %v577 = vpop.permute.xlu0 %576
        %580 = vset.pattern.permute.xlu0 0
        %581 = vperm.xlu0 %580, %v573
        %v582 = vpop.permute.xlu0 %581
        %v584 = vadd.f32 %v568, %v577
        %v585 = vadd.f32 %v569, %v577
        %v586 = vadd.f32 %v570, %v582
        %v587 = vadd.f32 %v571, %v582
        %588 = vst [vmem:[%s242] sm:$0xff] %v584
        %589 = vst [vmem:[%s242 + $0x8] sm:$0xff] %v585
        %590 = vst [vmem:[%s242 + $0x10] sm:$0xff] %v586
        %591 = vst [vmem:[%s242 + $0x18] sm:$0xff] %v587
        %s592 = sand.u32 %s153, 1
        %s593 = scalar_lea.sflag [#allocation3], %s592
        %s594 = sand.u32 %s153, 1
        %s595 = smul.addr %s594, 32
        %s596 = scalar_lea.vmem [#allocation2], %s595
        // Predicated region
        $region41: #{tpu_custom_call.1} parent=39 // pred_check
          %p597 = pneg %p163
        $region42: #{tpu_custom_call.1} parent=39 // pred_check_branch
          %599 = sbr.rel (%p597) target = $region44
        $region43: #{tpu_custom_call.1} parent=39 // pred_region
          %s600 = smul.u32 2, %s24
          %s602 = ssub.s32 512, 512
          %603 = vsyncadd %s593, %s602
          %s604 = smul.addr %s23, 4
          %s605 = sadd.s32 %s600, %s604
          %s606 = smul.addr %s605, 128
          %s607 = scalar_lea.hbm %s5, %s606
          %s608 = sshll.u32 %s596, 4
          %s609 = int_to_ptr.vmem [resolvable:$true] %s608
          %614 = dma.vmem_to_hbm [thread:$0]  %s609, 512, %s607, %s593, 256, 256, 16
        $region44: #{tpu_custom_call.1} parent=39 // pred_fallthru
          _
      $region40: #{tpu_custom_call.1} parent=5 // pred_fallthru
        _
      %p615 = scmp.le.s32.totalorder 2, %s14
      // Predicated region
      $region45: #{tpu_custom_call.1} parent=5 // pred_check
        %p616 = pneg %p615
      $region46: #{tpu_custom_call.1} parent=5 // pred_check_branch
        %618 = sbr.rel (%p616) target = $region48
      $region47: #{tpu_custom_call.1} parent=5 // pred_region
        %s619 = ssub.s32 %s14, 2
        // Predicated region
        $region49: #{tpu_custom_call.1} parent=47 // pred_check
          %p620 = pneg %p169
        $region50: #{tpu_custom_call.1} parent=47 // pred_check_branch
          %622 = sbr.rel (%p620) target = $region52
        $region51: #{tpu_custom_call.1} parent=47 // pred_region
          %s623 = sand.u32 %s154, 1
          %s624 = scalar_lea.sflag [#allocation3], %s623
          %s625 = sand.u32 %s154, 1
          %s626 = smul.addr %s625, 32
          %s627 = scalar_lea.vmem [#allocation2], %s626
          %628 = dma.done %s624, 512
        $region52: #{tpu_custom_call.1} parent=47 // pred_fallthru
          _
      $region48: #{tpu_custom_call.1} parent=5 // pred_fallthru
        _
    $region6: #{tpu_custom_call.1} parent=1 // loop_footer
      %s18 = sadd.s32 1, %s14
    $region7: #{tpu_custom_call.1} parent=1 // loop_footer_branch
      %13 = sbr.rel target = $region3
    $region8: #{tpu_custom_call.1} parent=1 // loop_exit
      _
    %629 = vsyncpa [#allocation3], 1
    %s630 = scalar_lea.sflag [#allocation3], 1
    %631 = vsyncpa %s630, 1

</llo_original>
